<compile_context>
chip_gen: v6e
topology: v6e:2x2x1
jax: 0.10.0
libtpu: 0.0.40
codegen_flags: <defaults>
</compile_context>

<pallas_src>
import functools

import jax
import jax.numpy as jnp
from jax.experimental import pallas as pl
from jax.experimental.pallas import tpu as pltpu

EPS = 1e-5


def _residual_block_kernel(x_ref, w1_ref, w2_ref, p_ref, o_ref, *, channels):
  """Fused residual block on a lane-dense (H, L) slab, L = N*W*C.

  x_ref : (H, L)   activations (also the residual)
  w1_ref: (3L, L)  conv1 weight, im2col block-Toeplitz (row blocks: h-1, h, h+1)
  w2_ref: (3L, L)  conv2 weight
  p_ref : (8, L)   packed BN params: rows 0..3 = gamma1, beta1, gamma2, beta2
  o_ref : (H, L)   output
  """
  H, L = x_ref.shape
  C = channels
  num_groups = L // C
  inv_count = 1.0 / float(H * num_groups)          # 1 / (N*H*W)

  # +-1 row-shift matrices with the zero H-halo built in.  (shift_dn @ y)[h]
  # = y[h-1] (row 0 -> 0), (shift_up @ y)[h] = y[h+1] (last row -> 0).
  row_i = jax.lax.broadcasted_iota(jnp.int32, (H, H), 0)
  col_j = jax.lax.broadcasted_iota(jnp.int32, (H, H), 1)
  shift_dn = (col_j == row_i - 1).astype(jnp.float32)
  shift_up = (col_j == row_i + 1).astype(jnp.float32)

  def conv3x3(y, w_ref):
    # Three accumulated matmuls (one per kernel row); no concat temp, no
    # scratch round-trip.  Conv bias is omitted: BN mean-subtraction cancels it.
    # TODO(synk): at real shapes cast matmul operands to bf16 (keep f32
    # accumulate) for the v5e/v6e/v7x MXU; kept f32 here to stay well inside
    # the 1e-3 validation tolerance.
    y_dn = jnp.dot(shift_dn, y, preferred_element_type=jnp.float32)
    y_up = jnp.dot(shift_up, y, preferred_element_type=jnp.float32)
    acc = jnp.dot(y_dn, w_ref[0:L, :], preferred_element_type=jnp.float32)
    acc = acc + jnp.dot(y, w_ref[L:2 * L, :], preferred_element_type=jnp.float32)
    acc = acc + jnp.dot(y_up, w_ref[2 * L:3 * L, :],
                        preferred_element_type=jnp.float32)
    return acc

  def channel_allreduce(row):
    # (1, L): every lane ends up with the sum over its channel class.
    # Exact f32 adds; circular lane rolls use the XLU slot.
    # NOTE: relies on L being an exact multiple of 128 (true here: L = 128).
    if num_groups & (num_groups - 1) == 0:           # power of two: butterfly
      res = row
      shift = C
      while shift < L:
        res = res + pltpu.roll(res, shift, 1)
        shift *= 2
      return res
    acc = row                                        # general exact fallback
    for g in range(1, num_groups):
      acc = acc + pltpu.roll(row, g * C, 1)
    return acc

  def batchnorm(y, g_row, be_row):
    # Training-mode BN, two-pass (matches reference numerics), all f32.
    sum_row = channel_allreduce(jnp.sum(y, axis=0, keepdims=True))   # (1, L)
    mean_row = sum_row * inv_count
    d = y - mean_row
    var_row = channel_allreduce(
        jnp.sum(d * d, axis=0, keepdims=True)) * inv_count           # (1, L)
    return d * (g_row * jax.lax.rsqrt(var_row + EPS)) + be_row

  x = x_ref[...]
  g1, be1 = p_ref[0:1, :], p_ref[1:2, :]
  g2, be2 = p_ref[2:3, :], p_ref[3:4, :]

  y1 = jnp.maximum(batchnorm(conv3x3(x, w1_ref), g1, be1), 0.0)
  y2 = batchnorm(conv3x3(y1, w2_ref), g2, be2)
  o_ref[...] = jnp.maximum(y2 + x, 0.0)


def _conv_weight_to_im2col(w_pt, n_batch, width):
  """PyTorch (Cout, Cin, 3, 3) -> (3L, L) im2col matrix, L = N*W*C.

  Block-Toeplitz over width (zero W-padding absorbed) and block-diagonal over
  batch; row blocks are ordered by kh (input rows h-1, h, h+1)."""
  c = w_pt.shape[0]
  w_k = jnp.transpose(w_pt, (2, 3, 1, 0)).astype(jnp.float32)  # (kh,kw,Cin,Cout)
  eye_n = jnp.eye(n_batch, dtype=jnp.float32)
  mats = []
  for kh in range(3):
    m = jnp.zeros((width * c, width * c), jnp.float32)
    for kw in range(3):
      # input col w_i = output col w_o + kw - 1; boundary taps drop out.
      shift = jnp.eye(width, width, k=1 - kw, dtype=jnp.float32)
      m = m + jnp.kron(shift, w_k[kh, kw])
    mats.append(jnp.kron(eye_n, m))          # (L, L), block-diag over batch
  return jnp.concatenate(mats, axis=0)        # (3L, L)


def prepare_residual_block_params(params, n_batch, width):
  """One-time (per parameter set) preprocessing.

  Conv biases b1/b2 are intentionally dropped: under training-mode BatchNorm a
  per-channel constant added before the mean subtraction cancels exactly, so
  removing it is bit-for-bit equivalent."""
  w1, _b1, g1, be1, w2, _b2, g2, be2 = params
  c = w1.shape[0]
  L = n_batch * width * c
  w1_big = _conv_weight_to_im2col(w1, n_batch, width)   # (3L, L)
  w2_big = _conv_weight_to_im2col(w2, n_batch, width)
  reps = n_batch * width

  def tile_row(v):
    return jnp.tile(v.astype(jnp.float32), reps)

  # One (8, L) slab instead of four separate (1, L) inputs (one DMA, one tile).
  p_slab = jnp.zeros((8, L), jnp.float32)
  p_slab = p_slab.at[0].set(tile_row(g1))
  p_slab = p_slab.at[1].set(tile_row(be1))
  p_slab = p_slab.at[2].set(tile_row(g2))
  p_slab = p_slab.at[3].set(tile_row(be2))
  return w1_big, w2_big, p_slab


@jax.jit
def residual_block_pallas(x_nchw, w1_big, w2_big, p_slab):
  """x_nchw: (N, C, H, W) float32. Returns (N, C, H, W) float32."""
  N, C, H, W = x_nchw.shape
  L = N * W * C

  # Lane-dense layout: A[h, n*(W*C) + w*C + c] = x[n, c, h, w].
  # TODO(synk): at real sizes keep activations in this slab across layers
  # instead of transposing NCHW<->slab in HBM around every block.
  x_l = jnp.transpose(x_nchw, (2, 0, 3, 1)).reshape(H, L).astype(jnp.float32)

  kernel = functools.partial(_residual_block_kernel, channels=int(C))
  vmem = pl.BlockSpec(memory_space=pltpu.MemorySpace.VMEM)
  out_l = pl.pallas_call(
      kernel,
      out_shape=jax.ShapeDtypeStruct((H, L), jnp.float32),
      in_specs=[vmem] * 4,
      out_specs=vmem,
  )(x_l, w1_big, w2_big, p_slab)

  # Back to NCHW to match the PyTorch module interface.
  return jnp.transpose(out_l.reshape(H, N, W, C), (1, 3, 0, 2))


def _reference_forward(x_nchw, params):
  """Plain-JAX reference (training-mode BN, WITH conv biases), for validation."""
  w1, b1, g1, be1, w2, b2, g2, be2 = params
  x = jnp.transpose(x_nchw, (0, 2, 3, 1)).astype(jnp.float32)

  def conv(y, w, b):
    w_hwio = jnp.transpose(w, (2, 3, 1, 0)).astype(jnp.float32)
    return jax.lax.conv_general_dilated(
        y, w_hwio, (1, 1), 'SAME',
        dimension_numbers=('NHWC', 'HWIO', 'NHWC')) + b.reshape(1, 1, 1, -1)

  def bn(y, g, be):
    m = y.mean((0, 1, 2), keepdims=True)
    v = ((y - m) ** 2).mean((0, 1, 2), keepdims=True)
    return (y - m) * jax.lax.rsqrt(v + EPS) * g.reshape(1, 1, 1, -1) \
        + be.reshape(1, 1, 1, -1)

  y = jax.nn.relu(bn(conv(x, w1, b1), g1, be1))
  y = bn(conv(y, w2, b2), g2, be2)
  y = jax.nn.relu(y + x)
  return jnp.transpose(y, (0, 3, 1, 2))


if __name__ == "__main__":
  N, C, H, W = 2, 4, 16, 16

  key = jax.random.PRNGKey(0)
  kx, kw1, kb1, kw2, kb2, kg1, kg2 = jax.random.split(key, 7)

  x = jax.random.normal(kx, (N, C, H, W), dtype=jnp.float32)

  # Deterministic synthetic parameters (PyTorch shapes).
  w1 = 0.1 * jax.random.normal(kw1, (C, C, 3, 3), dtype=jnp.float32)
  b1 = 0.1 * jax.random.normal(kb1, (C,), dtype=jnp.float32)
  w2 = 0.1 * jax.random.normal(kw2, (C, C, 3, 3), dtype=jnp.float32)
  b2 = 0.1 * jax.random.normal(kb2, (C,), dtype=jnp.float32)
  g1 = 1.0 + 0.05 * jax.random.normal(kg1, (C,), dtype=jnp.float32)
  be1 = jnp.linspace(-0.1, 0.1, C, dtype=jnp.float32)
  g2 = 1.0 + 0.05 * jax.random.normal(kg2, (C,), dtype=jnp.float32)
  be2 = jnp.linspace(0.1, -0.1, C, dtype=jnp.float32)

  params = (w1, b1, g1, be1, w2, b2, g2, be2)

  # Hoisted, once-per-parameter-set preprocessing (kron/tile NOT on the
  # per-call path anymore).
  prepared = jax.block_until_ready(prepare_residual_block_params(params, N, W))

  out = jax.block_until_ready(residual_block_pallas(x, *prepared))
  ref = jax.block_until_ready(_reference_forward(x, params))

  assert out.shape == (N, C, H, W)
  assert jnp.max(jnp.abs(out - ref)) < 1e-3, "mismatch vs JAX reference"

  print("KERNEL_OK")
</pallas_src>

<mosaic_0001>
module attributes {stable_mosaic.version = 11 : i64} {
  func.func @_residual_block_kernel(%arg0: memref<16x128xf32, #tpu.memory_space<vmem>>, %arg1: memref<384x128xf32, #tpu.memory_space<vmem>>, %arg2: memref<384x128xf32, #tpu.memory_space<vmem>>, %arg3: memref<8x128xf32, #tpu.memory_space<vmem>>, %arg4: memref<16x128xf32, #tpu.memory_space<vmem>>) attributes {dimension_semantics = [], scalar_prefetch = 0 : i64, scratch_operands = 0 : i64, tpu.core_type = #tpu.core_type<tc>} {
    %0 = tpu.iota {dimensions = array<i32: 0>} : vector<16x16xi32>
    %1 = tpu.iota {dimensions = array<i32: 1>} : vector<16x16xi32>
    %c1_i32 = arith.constant 1 : i32
    %2 = vector.broadcast %c1_i32 : i32 to vector<16x16xi32>
    %3 = arith.subi %0, %2 : vector<16x16xi32>
    %4 = arith.cmpi eq, %1, %3 : vector<16x16xi32>
    %5 = arith.extui %4 : vector<16x16xi1> to vector<16x16xi32>
    %6 = arith.sitofp %5 : vector<16x16xi32> to vector<16x16xf32>
    %c1_i32_0 = arith.constant 1 : i32
    %7 = vector.broadcast %c1_i32_0 : i32 to vector<16x16xi32>
    %8 = arith.addi %0, %7 : vector<16x16xi32>
    %9 = arith.cmpi eq, %1, %8 : vector<16x16xi32>
    %10 = arith.extui %9 : vector<16x16xi1> to vector<16x16xi32>
    %11 = arith.sitofp %10 : vector<16x16xi32> to vector<16x16xf32>
    %c0 = arith.constant 0 : index
    %c0_1 = arith.constant 0 : index
    %12 = vector.load %arg0[%c0, %c0_1] : memref<16x128xf32, #tpu.memory_space<vmem>>, vector<16x128xf32>
    %c0_2 = arith.constant 0 : index
    %c0_3 = arith.constant 0 : index
    %13 = vector.load %arg3[%c0_2, %c0_3] : memref<8x128xf32, #tpu.memory_space<vmem>>, vector<1x128xf32>
    %c1 = arith.constant 1 : index
    %c0_4 = arith.constant 0 : index
    %14 = vector.load %arg3[%c1, %c0_4] : memref<8x128xf32, #tpu.memory_space<vmem>>, vector<1x128xf32>
    %c2 = arith.constant 2 : index
    %c0_5 = arith.constant 0 : index
    %15 = vector.load %arg3[%c2, %c0_5] : memref<8x128xf32, #tpu.memory_space<vmem>>, vector<1x128xf32>
    %c3 = arith.constant 3 : index
    %c0_6 = arith.constant 0 : index
    %16 = vector.load %arg3[%c3, %c0_6] : memref<8x128xf32, #tpu.memory_space<vmem>>, vector<1x128xf32>
    %cst = arith.constant dense<0.000000e+00> : vector<16x128xf32>
    %17 = tpu.matmul %6, %12, %cst {dimension_numbers = #tpu.dot_dimension_numbers<[1], [0], [0], [1], [0, 0, 1, 1], [], []>} : vector<16x16xf32>, vector<16x128xf32>, vector<16x128xf32> -> vector<16x128xf32>
    %cst_7 = arith.constant dense<0.000000e+00> : vector<16x128xf32>
    %18 = tpu.matmul %11, %12, %cst_7 {dimension_numbers = #tpu.dot_dimension_numbers<[1], [0], [0], [1], [0, 0, 1, 1], [], []>} : vector<16x16xf32>, vector<16x128xf32>, vector<16x128xf32> -> vector<16x128xf32>
    %c0_8 = arith.constant 0 : index
    %c0_9 = arith.constant 0 : index
    %19 = vector.load %arg1[%c0_8, %c0_9] : memref<384x128xf32, #tpu.memory_space<vmem>>, vector<128x128xf32>
    %cst_10 = arith.constant dense<0.000000e+00> : vector<16x128xf32>
    %20 = tpu.matmul %17, %19, %cst_10 {dimension_numbers = #tpu.dot_dimension_numbers<[1], [0], [0], [1], [0, 0, 1, 1], [], []>} : vector<16x128xf32>, vector<128x128xf32>, vector<16x128xf32> -> vector<16x128xf32>
    %c128 = arith.constant 128 : index
    %c0_11 = arith.constant 0 : index
    %21 = vector.load %arg1[%c128, %c0_11] : memref<384x128xf32, #tpu.memory_space<vmem>>, vector<128x128xf32>
    %cst_12 = arith.constant dense<0.000000e+00> : vector<16x128xf32>
    %22 = tpu.matmul %12, %21, %cst_12 {dimension_numbers = #tpu.dot_dimension_numbers<[1], [0], [0], [1], [0, 0, 1, 1], [], []>} : vector<16x128xf32>, vector<128x128xf32>, vector<16x128xf32> -> vector<16x128xf32>
    %23 = arith.addf %20, %22 : vector<16x128xf32>
    %c256 = arith.constant 256 : index
    %c0_13 = arith.constant 0 : index
    %24 = vector.load %arg1[%c256, %c0_13] : memref<384x128xf32, #tpu.memory_space<vmem>>, vector<128x128xf32>
    %cst_14 = arith.constant dense<0.000000e+00> : vector<16x128xf32>
    %25 = tpu.matmul %18, %24, %cst_14 {dimension_numbers = #tpu.dot_dimension_numbers<[1], [0], [0], [1], [0, 0, 1, 1], [], []>} : vector<16x128xf32>, vector<128x128xf32>, vector<16x128xf32> -> vector<16x128xf32>
    %26 = arith.addf %23, %25 : vector<16x128xf32>
    %cst_15 = arith.constant dense<0.000000e+00> : vector<128xf32>
    %27 = vector.multi_reduction <add>, %26, %cst_15 [0] : vector<16x128xf32> to vector<128xf32>
    %28 = vector.shape_cast %27 : vector<128xf32> to vector<1x128xf32>
    %c4_i32 = arith.constant 4 : i32
    %29 = tpu.dynamic_rotate %28 by %c4_i32 dim 1 : vector<1x128xf32>, i32 -> vector<1x128xf32>
    %30 = arith.addf %28, %29 : vector<1x128xf32>
    %c8_i32 = arith.constant 8 : i32
    %31 = tpu.dynamic_rotate %30 by %c8_i32 dim 1 : vector<1x128xf32>, i32 -> vector<1x128xf32>
    %32 = arith.addf %30, %31 : vector<1x128xf32>
    %c16_i32 = arith.constant 16 : i32
    %33 = tpu.dynamic_rotate %32 by %c16_i32 dim 1 : vector<1x128xf32>, i32 -> vector<1x128xf32>
    %34 = arith.addf %32, %33 : vector<1x128xf32>
    %c32_i32 = arith.constant 32 : i32
    %35 = tpu.dynamic_rotate %34 by %c32_i32 dim 1 : vector<1x128xf32>, i32 -> vector<1x128xf32>
    %36 = arith.addf %34, %35 : vector<1x128xf32>
    %c64_i32 = arith.constant 64 : i32
    %37 = tpu.dynamic_rotate %36 by %c64_i32 dim 1 : vector<1x128xf32>, i32 -> vector<1x128xf32>
    %38 = arith.addf %36, %37 : vector<1x128xf32>
    %cst_16 = arith.constant 0.001953125 : f32
    %39 = vector.broadcast %cst_16 : f32 to vector<1x128xf32>
    %40 = arith.mulf %38, %39 : vector<1x128xf32>
    %41 = vector.broadcast %40 : vector<1x128xf32> to vector<16x128xf32>
    %42 = arith.subf %26, %41 : vector<16x128xf32>
    %43 = arith.mulf %42, %42 : vector<16x128xf32>
    %cst_17 = arith.constant dense<0.000000e+00> : vector<128xf32>
    %44 = vector.multi_reduction <add>, %43, %cst_17 [0] : vector<16x128xf32> to vector<128xf32>
    %45 = vector.shape_cast %44 : vector<128xf32> to vector<1x128xf32>
    %c4_i32_18 = arith.constant 4 : i32
    %46 = tpu.dynamic_rotate %45 by %c4_i32_18 dim 1 : vector<1x128xf32>, i32 -> vector<1x128xf32>
    %47 = arith.addf %45, %46 : vector<1x128xf32>
    %c8_i32_19 = arith.constant 8 : i32
    %48 = tpu.dynamic_rotate %47 by %c8_i32_19 dim 1 : vector<1x128xf32>, i32 -> vector<1x128xf32>
    %49 = arith.addf %47, %48 : vector<1x128xf32>
    %c16_i32_20 = arith.constant 16 : i32
    %50 = tpu.dynamic_rotate %49 by %c16_i32_20 dim 1 : vector<1x128xf32>, i32 -> vector<1x128xf32>
    %51 = arith.addf %49, %50 : vector<1x128xf32>
    %c32_i32_21 = arith.constant 32 : i32
    %52 = tpu.dynamic_rotate %51 by %c32_i32_21 dim 1 : vector<1x128xf32>, i32 -> vector<1x128xf32>
    %53 = arith.addf %51, %52 : vector<1x128xf32>
    %c64_i32_22 = arith.constant 64 : i32
    %54 = tpu.dynamic_rotate %53 by %c64_i32_22 dim 1 : vector<1x128xf32>, i32 -> vector<1x128xf32>
    %55 = arith.addf %53, %54 : vector<1x128xf32>
    %cst_23 = arith.constant 0.001953125 : f32
    %56 = vector.broadcast %cst_23 : f32 to vector<1x128xf32>
    %57 = arith.mulf %55, %56 : vector<1x128xf32>
    %cst_24 = arith.constant 9.99999974E-6 : f32
    %58 = vector.broadcast %cst_24 : f32 to vector<1x128xf32>
    %59 = arith.addf %57, %58 : vector<1x128xf32>
    %60 = math.rsqrt %59 : vector<1x128xf32>
    %61 = arith.mulf %13, %60 : vector<1x128xf32>
    %62 = vector.broadcast %61 : vector<1x128xf32> to vector<16x128xf32>
    %63 = arith.mulf %42, %62 : vector<16x128xf32>
    %64 = vector.broadcast %14 : vector<1x128xf32> to vector<16x128xf32>
    %65 = arith.addf %63, %64 : vector<16x128xf32>
    %cst_25 = arith.constant 0.000000e+00 : f32
    %66 = vector.broadcast %cst_25 : f32 to vector<16x128xf32>
    %67 = arith.maximumf %65, %66 : vector<16x128xf32>
    %cst_26 = arith.constant dense<0.000000e+00> : vector<16x128xf32>
    %68 = tpu.matmul %6, %67, %cst_26 {dimension_numbers = #tpu.dot_dimension_numbers<[1], [0], [0], [1], [0, 0, 1, 1], [], []>} : vector<16x16xf32>, vector<16x128xf32>, vector<16x128xf32> -> vector<16x128xf32>
    %cst_27 = arith.constant dense<0.000000e+00> : vector<16x128xf32>
    %69 = tpu.matmul %11, %67, %cst_27 {dimension_numbers = #tpu.dot_dimension_numbers<[1], [0], [0], [1], [0, 0, 1, 1], [], []>} : vector<16x16xf32>, vector<16x128xf32>, vector<16x128xf32> -> vector<16x128xf32>
    %c0_28 = arith.constant 0 : index
    %c0_29 = arith.constant 0 : index
    %70 = vector.load %arg2[%c0_28, %c0_29] : memref<384x128xf32, #tpu.memory_space<vmem>>, vector<128x128xf32>
    %cst_30 = arith.constant dense<0.000000e+00> : vector<16x128xf32>
    %71 = tpu.matmul %68, %70, %cst_30 {dimension_numbers = #tpu.dot_dimension_numbers<[1], [0], [0], [1], [0, 0, 1, 1], [], []>} : vector<16x128xf32>, vector<128x128xf32>, vector<16x128xf32> -> vector<16x128xf32>
    %c128_31 = arith.constant 128 : index
    %c0_32 = arith.constant 0 : index
    %72 = vector.load %arg2[%c128_31, %c0_32] : memref<384x128xf32, #tpu.memory_space<vmem>>, vector<128x128xf32>
    %cst_33 = arith.constant dense<0.000000e+00> : vector<16x128xf32>
    %73 = tpu.matmul %67, %72, %cst_33 {dimension_numbers = #tpu.dot_dimension_numbers<[1], [0], [0], [1], [0, 0, 1, 1], [], []>} : vector<16x128xf32>, vector<128x128xf32>, vector<16x128xf32> -> vector<16x128xf32>
    %74 = arith.addf %71, %73 : vector<16x128xf32>
    %c256_34 = arith.constant 256 : index
    %c0_35 = arith.constant 0 : index
    %75 = vector.load %arg2[%c256_34, %c0_35] : memref<384x128xf32, #tpu.memory_space<vmem>>, vector<128x128xf32>
    %cst_36 = arith.constant dense<0.000000e+00> : vector<16x128xf32>
    %76 = tpu.matmul %69, %75, %cst_36 {dimension_numbers = #tpu.dot_dimension_numbers<[1], [0], [0], [1], [0, 0, 1, 1], [], []>} : vector<16x128xf32>, vector<128x128xf32>, vector<16x128xf32> -> vector<16x128xf32>
    %77 = arith.addf %74, %76 : vector<16x128xf32>
    %cst_37 = arith.constant dense<0.000000e+00> : vector<128xf32>
    %78 = vector.multi_reduction <add>, %77, %cst_37 [0] : vector<16x128xf32> to vector<128xf32>
    %79 = vector.shape_cast %78 : vector<128xf32> to vector<1x128xf32>
    %c4_i32_38 = arith.constant 4 : i32
    %80 = tpu.dynamic_rotate %79 by %c4_i32_38 dim 1 : vector<1x128xf32>, i32 -> vector<1x128xf32>
    %81 = arith.addf %79, %80 : vector<1x128xf32>
    %c8_i32_39 = arith.constant 8 : i32
    %82 = tpu.dynamic_rotate %81 by %c8_i32_39 dim 1 : vector<1x128xf32>, i32 -> vector<1x128xf32>
    %83 = arith.addf %81, %82 : vector<1x128xf32>
    %c16_i32_40 = arith.constant 16 : i32
    %84 = tpu.dynamic_rotate %83 by %c16_i32_40 dim 1 : vector<1x128xf32>, i32 -> vector<1x128xf32>
    %85 = arith.addf %83, %84 : vector<1x128xf32>
    %c32_i32_41 = arith.constant 32 : i32
    %86 = tpu.dynamic_rotate %85 by %c32_i32_41 dim 1 : vector<1x128xf32>, i32 -> vector<1x128xf32>
    %87 = arith.addf %85, %86 : vector<1x128xf32>
    %c64_i32_42 = arith.constant 64 : i32
    %88 = tpu.dynamic_rotate %87 by %c64_i32_42 dim 1 : vector<1x128xf32>, i32 -> vector<1x128xf32>
    %89 = arith.addf %87, %88 : vector<1x128xf32>
    %cst_43 = arith.constant 0.001953125 : f32
    %90 = vector.broadcast %cst_43 : f32 to vector<1x128xf32>
    %91 = arith.mulf %89, %90 : vector<1x128xf32>
    %92 = vector.broadcast %91 : vector<1x128xf32> to vector<16x128xf32>
    %93 = arith.subf %77, %92 : vector<16x128xf32>
    %94 = arith.mulf %93, %93 : vector<16x128xf32>
    %cst_44 = arith.constant dense<0.000000e+00> : vector<128xf32>
    %95 = vector.multi_reduction <add>, %94, %cst_44 [0] : vector<16x128xf32> to vector<128xf32>
    %96 = vector.shape_cast %95 : vector<128xf32> to vector<1x128xf32>
    %c4_i32_45 = arith.constant 4 : i32
    %97 = tpu.dynamic_rotate %96 by %c4_i32_45 dim 1 : vector<1x128xf32>, i32 -> vector<1x128xf32>
    %98 = arith.addf %96, %97 : vector<1x128xf32>
    %c8_i32_46 = arith.constant 8 : i32
    %99 = tpu.dynamic_rotate %98 by %c8_i32_46 dim 1 : vector<1x128xf32>, i32 -> vector<1x128xf32>
    %100 = arith.addf %98, %99 : vector<1x128xf32>
    %c16_i32_47 = arith.constant 16 : i32
    %101 = tpu.dynamic_rotate %100 by %c16_i32_47 dim 1 : vector<1x128xf32>, i32 -> vector<1x128xf32>
    %102 = arith.addf %100, %101 : vector<1x128xf32>
    %c32_i32_48 = arith.constant 32 : i32
    %103 = tpu.dynamic_rotate %102 by %c32_i32_48 dim 1 : vector<1x128xf32>, i32 -> vector<1x128xf32>
    %104 = arith.addf %102, %103 : vector<1x128xf32>
    %c64_i32_49 = arith.constant 64 : i32
    %105 = tpu.dynamic_rotate %104 by %c64_i32_49 dim 1 : vector<1x128xf32>, i32 -> vector<1x128xf32>
    %106 = arith.addf %104, %105 : vector<1x128xf32>
    %cst_50 = arith.constant 0.001953125 : f32
    %107 = vector.broadcast %cst_50 : f32 to vector<1x128xf32>
    %108 = arith.mulf %106, %107 : vector<1x128xf32>
    %cst_51 = arith.constant 9.99999974E-6 : f32
    %109 = vector.broadcast %cst_51 : f32 to vector<1x128xf32>
    %110 = arith.addf %108, %109 : vector<1x128xf32>
    %111 = math.rsqrt %110 : vector<1x128xf32>
    %112 = arith.mulf %15, %111 : vector<1x128xf32>
    %113 = vector.broadcast %112 : vector<1x128xf32> to vector<16x128xf32>
    %114 = arith.mulf %93, %113 : vector<16x128xf32>
    %115 = vector.broadcast %16 : vector<1x128xf32> to vector<16x128xf32>
    %116 = arith.addf %114, %115 : vector<16x128xf32>
    %117 = arith.addf %116, %12 : vector<16x128xf32>
    %cst_52 = arith.constant 0.000000e+00 : f32
    %118 = vector.broadcast %cst_52 : f32 to vector<16x128xf32>
    %119 = arith.maximumf %117, %118 : vector<16x128xf32>
    %c0_53 = arith.constant 0 : index
    %c0_54 = arith.constant 0 : index
    %120 = vector.load %arg4[%c0_53, %c0_54] : memref<16x128xf32, #tpu.memory_space<vmem>>, vector<16x128xf32>
    tpu.vector_store %arg4[%c0_53, %c0_54], %119 {strides = array<i32>} : memref<16x128xf32, #tpu.memory_space<vmem>>, vector<16x128xf32>,
    return
  }
}

</mosaic_0001>

<llo_original>
// kernel: residual_block_pallas.1
$region0: #{residual_block_pallas.1}
  #allocation0 [shape = 'u32[]', space=smem, size = 0x4, offset = 0x4, fixed_abs, tag = 'smem constant byte address 0x4 - core index']
  #allocation1 [shape = 'u32[144,128]{1,0:T(1,128)}', space=vmem, size = 0x12000, scoped, tag = 'internal scratch']
  %s0 = inlined_call_operand.vmem [shape: f32[16,128], index: 0, kind: input, shape index: {}]
  %s1 = inlined_call_operand.vmem [shape: f32[384,128], index: 1, kind: input, shape index: {}]
  %s2 = inlined_call_operand.hbm [shape: f32[384,128], index: 2, kind: input, shape index: {}]
  %s3 = inlined_call_operand.vmem [shape: f32[8,128], index: 3, kind: input, shape index: {}]
  %s4 = inlined_call_operand.vmem [shape: f32[16,128], index: 4, kind: output, shape index: {}]
  %s5 = sld [smem:[#allocation0]]
  $region30: #{residual_block_pallas.1} parent=0
    _
  %s7 = ssub.s32 1, %s5
  %s8 = scalar_select 0, %s7, %s5
  $region1: #{residual_block_pallas.1} parent=0
    #allocation2 [shape = 'u8[196608]{0}', space=vmem, size = 0x30000, scoped, tag = 'input window, operand 2, single buffered']
    #allocation3 [shape = 's32[1]{0}', space=sflag, size = 0x4, scoped, tag = 'scoped memory for residual_block_pallas.1']
    %9 = vsyncpa [#allocation3], 0
    // Predicated region
    $region2: #{residual_block_pallas.1} parent=1 // pred_check
      _
    $region3: #{residual_block_pallas.1} parent=1 // pred_check_branch
      %11 = sbr.rel (0) target = $region5
    $region4: #{residual_block_pallas.1} parent=1 // pred_region
      _
    $region5: #{residual_block_pallas.1} parent=1 // pred_fallthru
      _
    // Predicated region
    $region6: #{residual_block_pallas.1} parent=1 // pred_check
      _
    $region7: #{residual_block_pallas.1} parent=1 // pred_check_branch
      %13 = sbr.rel (0) target = $region9
    $region8: #{residual_block_pallas.1} parent=1 // pred_region
      _
    $region9: #{residual_block_pallas.1} parent=1 // pred_fallthru
      _
    // Predicated region
    $region10: #{residual_block_pallas.1} parent=1 // pred_check
      _
    $region11: #{residual_block_pallas.1} parent=1 // pred_check_branch
      %15 = sbr.rel (0) target = $region13
    $region12: #{residual_block_pallas.1} parent=1 // pred_region
      %s17 = ssub.s32 6144, 6144
      %18 = vsyncadd [#allocation3], %s17
      %s19 = sshll.u32 [#allocation2], 4
      %s20 = int_to_ptr.vmem [resolvable:$true] %s19
      %25 = dma.hbm_to_vmem [thread:$0]  %s2, 6144, %s20, [#allocation3], 128, 128, 8
    $region13: #{residual_block_pallas.1} parent=1 // pred_fallthru
      _
    // Predicated region
    $region14: #{residual_block_pallas.1} parent=1 // pred_check
      _
    $region15: #{residual_block_pallas.1} parent=1 // pred_check_branch
      %27 = sbr.rel (0) target = $region17
    $region16: #{residual_block_pallas.1} parent=1 // pred_region
      _
    $region17: #{residual_block_pallas.1} parent=1 // pred_fallthru
      _
    // Predicated region
    $region18: #{residual_block_pallas.1} parent=1 // pred_check
      _
    $region19: #{residual_block_pallas.1} parent=1 // pred_check_branch
      %29 = sbr.rel (0) target = $region21
    $region20: #{residual_block_pallas.1} parent=1 // pred_region
      %30 = dma.done [#allocation3], 6144
    $region21: #{residual_block_pallas.1} parent=1 // pred_fallthru
      _
    %v31 = vlaneseq
    %v32 = vshrl.u32 %v31, 7
    %v33 = vadd.s32 %v32, 8
    %v34 = vlaneseq
    %v35 = vand.u32 %v34, 127
    %v36 = vsub.s32 %v32, 1
    %v37 = vsub.s32 %v33, 1
    %vm38 = vcmp.eq.s32.totalorder %v35, %v36
    %vm39 = vcmp.eq.s32.totalorder %v35, %v37
    %v40 = vsel %vm38, 1, 0
    %v41 = vsel %vm39, 1, 0
    %v42 = vcvt.s32.f32 %v40
    %v43 = vcvt.s32.f32 %v41
    %v44 = vadd.s32 %v32, 1
    %v45 = vadd.s32 %v33, 1
    %vm46 = vcmp.eq.s32.totalorder %v35, %v44
    %vm47 = vcmp.eq.s32.totalorder %v35, %v45
    %v48 = vsel %vm46, 1, 0
    %v49 = vsel %vm47, 1, 0
    %v50 = vcvt.s32.f32 %v48
    %v51 = vcvt.s32.f32 %v49
    %v52 = vld [vmem:[%s0] sm:$0xff]
    %v53 = vld [vmem:[%s0 + $0x8] sm:$0xff]
    %v54 = vld [vmem:[%s3] sm:$0x1]
    %v55 = vld [vmem:[%s3 + $0x1] sm:$0x1]
    %v56 = vld [vmem:[%s3 + $0x2] sm:$0x1]
    %v57 = vld [vmem:[%s3 + $0x3] sm:$0x1]
    %vm58 = vcmask 130048
    %v60 = vsel %vm58, %v42, 0
    %v63 = vsel %vm58, %v43, 0
    %65 = vmatprep.subr.mxu0 0.0
    %66 = vmatpush1.msra.mxu0 0.0
    %67 = vmatprep.subr.mxu0 0.0
    %68 = vmatpush1.msra.mxu0 0.0
    %69 = vmatprep.subr.mxu0 0.0
    %70 = vmatpush1.msra.mxu0 0.0
    %71 = vmatprep.subr.mxu0 0.0
    %72 = vmatpush1.msra.mxu0 0.0
    %73 = vmatprep.subr.mxu0 0.0
    %74 = vmatpush1.msra.mxu0 0.0
    %75 = vmatprep.subr.mxu0 0.0
    %76 = vmatpush1.msra.mxu0 0.0
    %77 = vmatprep.subr.mxu0 0.0
    %78 = vmatpush1.msra.mxu0 0.0
    %79 = vmatprep.subr.mxu0 0.0
    %80 = vmatpush1.msra.mxu0 0.0
    %81 = vmatprep.subr.mxu0 0.0
    %82 = vmatpush1.msra.mxu0 0.0
    %83 = vmatprep.subr.mxu0 0.0
    %84 = vmatpush1.msra.mxu0 0.0
    %85 = vmatprep.subr.mxu0 0.0
    %86 = vmatpush1.msra.mxu0 0.0
    %87 = vmatprep.subr.mxu0 0.0
    %88 = vmatpush1.msra.mxu0 0.0
    %89 = vmatprep.subr.mxu0 0.0
    %90 = vmatpush1.msra.mxu0 0.0
    %91 = vmatprep.subr.mxu0 0.0
    %92 = vmatpush1.msra.mxu0 0.0
    %93 = vmatprep.subr.mxu0 0.0
    %94 = vmatpush1.msra.mxu0 %v53
    %95 = vmatprep.subr.mxu0 0.0
    %96 = vmatpush1.msra.mxu0 %v52
    %97 = vmatprep.subr.mxu0 0.0
    %98 = vmatpush2.msra.mxu0 0.0
    %99 = vmatprep.subr.mxu0 0.0
    %100 = vmatpush2.msra.mxu0 0.0
    %101 = vmatprep.subr.mxu0 0.0
    %102 = vmatpush2.msra.mxu0 0.0
    %103 = vmatprep.subr.mxu0 0.0
    %104 = vmatpush2.msra.mxu0 0.0
    %105 = vmatprep.subr.mxu0 0.0
    %106 = vmatpush2.msra.mxu0 0.0
    %107 = vmatprep.subr.mxu0 0.0
    %108 = vmatpush2.msra.mxu0 0.0
    %109 = vmatprep.subr.mxu0 0.0
    %110 = vmatpush2.msra.mxu0 0.0
    %111 = vmatprep.subr.mxu0 0.0
    %112 = vmatpush2.msra.mxu0 0.0
    %113 = vmatprep.subr.mxu0 0.0
    %114 = vmatpush2.msra.mxu0 0.0
    %115 = vmatprep.subr.mxu0 0.0
    %116 = vmatpush2.msra.mxu0 0.0
    %117 = vmatprep.subr.mxu0 0.0
    %118 = vmatpush2.msra.mxu0 0.0
    %119 = vmatprep.subr.mxu0 0.0
    %120 = vmatpush2.msra.mxu0 0.0
    %121 = vmatprep.subr.mxu0 0.0
    %122 = vmatpush2.msra.mxu0 0.0
    %123 = vmatprep.subr.mxu0 0.0
    %124 = vmatpush2.msra.mxu0 0.0
    %125 = vmatprep.subr.mxu0 0.0
    %126 = vmatpush2.msra.mxu0 0.0
    %127 = vmatprep.subr.mxu0 0.0
    %128 = vmatpush2.msra.mxu0 0.0
    %129 = vmatprep.mubr.f32.mxu0 0.0
    %130 = vmatmul.mubr.f32.gmra.mxu0 %v60
    %v131 = vpop.f32.mrf.mxu0
    %v132 = vadd.f32 0.0, %v131
    %v133 = vpop.f32.mrf.mxu0
    %134 = vmatprep.mubr.f32.mxu0 0.0
    %135 = vmatmul.mubr.f32.gmra.mxu0 %v63
    %v136 = vpop.f32.mrf.mxu0
    %v137 = vadd.f32 0.0, %v136
    %v138 = vpop.f32.mrf.mxu0
    %139 = vdwg.mxu0
    %v141 = vsel %vm58, %v50, 0
    %v144 = vsel %vm58, %v51, 0
    %146 = vmatprep.subr.mxu0 0.0
    %147 = vmatpush1.msra.mxu0 0.0
    %148 = vmatprep.subr.mxu0 0.0
    %149 = vmatpush1.msra.mxu0 0.0
    %150 = vmatprep.subr.mxu0 0.0
    %151 = vmatpush1.msra.mxu0 0.0
    %152 = vmatprep.subr.mxu0 0.0
    %153 = vmatpush1.msra.mxu0 0.0
    %154 = vmatprep.subr.mxu0 0.0
    %155 = vmatpush1.msra.mxu0 0.0
    %156 = vmatprep.subr.mxu0 0.0
    %157 = vmatpush1.msra.mxu0 0.0
    %158 = vmatprep.subr.mxu0 0.0
    %159 = vmatpush1.msra.mxu0 0.0
    %160 = vmatprep.subr.mxu0 0.0
    %161 = vmatpush1.msra.mxu0 0.0
    %162 = vmatprep.subr.mxu0 0.0
    %163 = vmatpush1.msra.mxu0 0.0
    %164 = vmatprep.subr.mxu0 0.0
    %165 = vmatpush1.msra.mxu0 0.0
    %166 = vmatprep.subr.mxu0 0.0
    %167 = vmatpush1.msra.mxu0 0.0
    %168 = vmatprep.subr.mxu0 0.0
    %169 = vmatpush1.msra.mxu0 0.0
    %170 = vmatprep.subr.mxu0 0.0
    %171 = vmatpush1.msra.mxu0 0.0
    %172 = vmatprep.subr.mxu0 0.0
    %173 = vmatpush1.msra.mxu0 0.0
    %174 = vmatprep.subr.mxu0 0.0
    %175 = vmatpush1.msra.mxu0 %v53
    %176 = vmatprep.subr.mxu0 0.0
    %177 = vmatpush1.msra.mxu0 %v52
    %178 = vmatprep.subr.mxu0 0.0
    %179 = vmatpush2.msra.mxu0 0.0
    %180 = vmatprep.subr.mxu0 0.0
    %181 = vmatpush2.msra.mxu0 0.0
    %182 = vmatprep.subr.mxu0 0.0
    %183 = vmatpush2.msra.mxu0 0.0
    %184 = vmatprep.subr.mxu0 0.0
    %185 = vmatpush2.msra.mxu0 0.0
    %186 = vmatprep.subr.mxu0 0.0
    %187 = vmatpush2.msra.mxu0 0.0
    %188 = vmatprep.subr.mxu0 0.0
    %189 = vmatpush2.msra.mxu0 0.0
    %190 = vmatprep.subr.mxu0 0.0
    %191 = vmatpush2.msra.mxu0 0.0
    %192 = vmatprep.subr.mxu0 0.0
    %193 = vmatpush2.msra.mxu0 0.0
    %194 = vmatprep.subr.mxu0 0.0
    %195 = vmatpush2.msra.mxu0 0.0
    %196 = vmatprep.subr.mxu0 0.0
    %197 = vmatpush2.msra.mxu0 0.0
    %198 = vmatprep.subr.mxu0 0.0
    %199 = vmatpush2.msra.mxu0 0.0
    %200 = vmatprep.subr.mxu0 0.0
    %201 = vmatpush2.msra.mxu0 0.0
    %202 = vmatprep.subr.mxu0 0.0
    %203 = vmatpush2.msra.mxu0 0.0
    %204 = vmatprep.subr.mxu0 0.0
    %205 = vmatpush2.msra.mxu0 0.0
    %206 = vmatprep.subr.mxu0 0.0
    %207 = vmatpush2.msra.mxu0 0.0
    %208 = vmatprep.subr.mxu0 0.0
    %209 = vmatpush2.msra.mxu0 0.0
    %210 = vmatprep.mubr.f32.mxu0 0.0
    %211 = vmatmul.mubr.f32.gmra.mxu0 %v141
    %v212 = vpop.f32.mrf.mxu0
    %v213 = vadd.f32 0.0, %v212
    %v214 = vpop.f32.mrf.mxu0
    %215 = vmatprep.mubr.f32.mxu0 0.0
    %216 = vmatmul.mubr.f32.gmra.mxu0 %v144
    %v217 = vpop.f32.mrf.mxu0
    %v218 = vadd.f32 0.0, %v217
    %v219 = vpop.f32.mrf.mxu0
    %220 = vdwg.mxu0
    %v221 = vld [vmem:[%s1] sm:$0xff]
    %v222 = vld [vmem:[%s1 + $0x8] sm:$0xff]
    %v223 = vld [vmem:[%s1 + $0x10] sm:$0xff]
    %v224 = vld [vmem:[%s1 + $0x18] sm:$0xff]
    %v225 = vld [vmem:[%s1 + $0x20] sm:$0xff]
    %v226 = vld [vmem:[%s1 + $0x28] sm:$0xff]
    %v227 = vld [vmem:[%s1 + $0x30] sm:$0xff]
    %v228 = vld [vmem:[%s1 + $0x38] sm:$0xff]
    %v229 = vld [vmem:[%s1 + $0x40] sm:$0xff]
    %v230 = vld [vmem:[%s1 + $0x48] sm:$0xff]
    %v231 = vld [vmem:[%s1 + $0x50] sm:$0xff]
    %v232 = vld [vmem:[%s1 + $0x58] sm:$0xff]
    %v233 = vld [vmem:[%s1 + $0x60] sm:$0xff]
    %v234 = vld [vmem:[%s1 + $0x68] sm:$0xff]
    %v235 = vld [vmem:[%s1 + $0x70] sm:$0xff]
    %v236 = vld [vmem:[%s1 + $0x78] sm:$0xff]
    %v237 = vld [vmem:[%s1 + $0x80] sm:$0xff]
    %v238 = vld [vmem:[%s1 + $0x88] sm:$0xff]
    %v239 = vld [vmem:[%s1 + $0x90] sm:$0xff]
    %v240 = vld [vmem:[%s1 + $0x98] sm:$0xff]
    %v241 = vld [vmem:[%s1 + $0xa0] sm:$0xff]
    %v242 = vld [vmem:[%s1 + $0xa8] sm:$0xff]
    %v243 = vld [vmem:[%s1 + $0xb0] sm:$0xff]
    %v244 = vld [vmem:[%s1 + $0xb8] sm:$0xff]
    %v245 = vld [vmem:[%s1 + $0xc0] sm:$0xff]
    %v246 = vld [vmem:[%s1 + $0xc8] sm:$0xff]
    %v247 = vld [vmem:[%s1 + $0xd0] sm:$0xff]
    %v248 = vld [vmem:[%s1 + $0xd8] sm:$0xff]
    %v249 = vld [vmem:[%s1 + $0xe0] sm:$0xff]
    %v250 = vld [vmem:[%s1 + $0xe8] sm:$0xff]
    %v251 = vld [vmem:[%s1 + $0xf0] sm:$0xff]
    %v252 = vld [vmem:[%s1 + $0xf8] sm:$0xff]
    %253 = vmatprep.subr.mxu0 0.0
    %254 = vmatpush1.msra.mxu0 %v252
    %255 = vmatprep.subr.mxu0 0.0
    %256 = vmatpush1.msra.mxu0 %v251
    %257 = vmatprep.subr.mxu0 0.0
    %258 = vmatpush1.msra.mxu0 %v250
    %259 = vmatprep.subr.mxu0 0.0
    %260 = vmatpush1.msra.mxu0 %v249
    %261 = vmatprep.subr.mxu0 0.0
    %262 = vmatpush1.msra.mxu0 %v248
    %263 = vmatprep.subr.mxu0 0.0
    %264 = vmatpush1.msra.mxu0 %v247
    %265 = vmatprep.subr.mxu0 0.0
    %266 = vmatpush1.msra.mxu0 %v246
    %267 = vmatprep.subr.mxu0 0.0
    %268 = vmatpush1.msra.mxu0 %v245
    %269 = vmatprep.subr.mxu0 0.0
    %270 = vmatpush1.msra.mxu0 %v244
    %271 = vmatprep.subr.mxu0 0.0
    %272 = vmatpush1.msra.mxu0 %v243
    %273 = vmatprep.subr.mxu0 0.0
    %274 = vmatpush1.msra.mxu0 %v242
    %275 = vmatprep.subr.mxu0 0.0
    %276 = vmatpush1.msra.mxu0 %v241
    %277 = vmatprep.subr.mxu0 0.0
    %278 = vmatpush1.msra.mxu0 %v240
    %279 = vmatprep.subr.mxu0 0.0
    %280 = vmatpush1.msra.mxu0 %v239
    %281 = vmatprep.subr.mxu0 0.0
    %282 = vmatpush1.msra.mxu0 %v238
    %283 = vmatprep.subr.mxu0 0.0
    %284 = vmatpush1.msra.mxu0 %v237
    %285 = vmatprep.subr.mxu0 0.0
    %286 = vmatpush2.msra.mxu0 0.0
    %287 = vmatprep.subr.mxu0 0.0
    %288 = vmatpush2.msra.mxu0 0.0
    %289 = vmatprep.subr.mxu0 0.0
    %290 = vmatpush2.msra.mxu0 0.0
    %291 = vmatprep.subr.mxu0 0.0
    %292 = vmatpush2.msra.mxu0 0.0
    %293 = vmatprep.subr.mxu0 0.0
    %294 = vmatpush2.msra.mxu0 0.0
    %295 = vmatprep.subr.mxu0 0.0
    %296 = vmatpush2.msra.mxu0 0.0
    %297 = vmatprep.subr.mxu0 0.0
    %298 = vmatpush2.msra.mxu0 0.0
    %299 = vmatprep.subr.mxu0 0.0
    %300 = vmatpush2.msra.mxu0 0.0
    %301 = vmatprep.subr.mxu0 0.0
    %302 = vmatpush2.msra.mxu0 0.0
    %303 = vmatprep.subr.mxu0 0.0
    %304 = vmatpush2.msra.mxu0 0.0
    %305 = vmatprep.subr.mxu0 0.0
    %306 = vmatpush2.msra.mxu0 0.0
    %307 = vmatprep.subr.mxu0 0.0
    %308 = vmatpush2.msra.mxu0 0.0
    %309 = vmatprep.subr.mxu0 0.0
    %310 = vmatpush2.msra.mxu0 0.0
    %311 = vmatprep.subr.mxu0 0.0
    %312 = vmatpush2.msra.mxu0 0.0
    %313 = vmatprep.subr.mxu0 0.0
    %314 = vmatpush2.msra.mxu0 0.0
    %315 = vmatprep.subr.mxu0 0.0
    %316 = vmatpush2.msra.mxu0 0.0
    %317 = vmatprep.mubr.f32.mxu0 0.0
    %318 = vmatmul.mubr.f32.gmra.mxu0 %v52
    %v319 = vpop.f32.mrf.mxu0
    %v320 = vadd.f32 0.0, %v319
    %v321 = vpop.f32.mrf.mxu0
    %322 = vmatprep.mubr.f32.mxu0 0.0
    %323 = vmatmul.mubr.f32.gmra.mxu0 %v53
    %v324 = vpop.f32.mrf.mxu0
    %v325 = vadd.f32 0.0, %v324
    %v326 = vpop.f32.mrf.mxu0
    %327 = vdwg.mxu0
    %328 = vmatprep.subr.mxu0 0.0
    %329 = vmatpush1.msra.mxu0 %v236
    %330 = vmatprep.subr.mxu0 0.0
    %331 = vmatpush1.msra.mxu0 %v235
    %332 = vmatprep.subr.mxu0 0.0
    %333 = vmatpush1.msra.mxu0 %v234
    %334 = vmatprep.subr.mxu0 0.0
    %335 = vmatpush1.msra.mxu0 %v233
    %336 = vmatprep.subr.mxu0 0.0
    %337 = vmatpush1.msra.mxu0 %v232
    %338 = vmatprep.subr.mxu0 0.0
    %339 = vmatpush1.msra.mxu0 %v231
    %340 = vmatprep.subr.mxu0 0.0
    %341 = vmatpush1.msra.mxu0 %v230
    %342 = vmatprep.subr.mxu0 0.0
    %343 = vmatpush1.msra.mxu0 %v229
    %344 = vmatprep.subr.mxu0 0.0
    %345 = vmatpush1.msra.mxu0 %v228
    %346 = vmatprep.subr.mxu0 0.0
    %347 = vmatpush1.msra.mxu0 %v227
    %348 = vmatprep.subr.mxu0 0.0
    %349 = vmatpush1.msra.mxu0 %v226
    %350 = vmatprep.subr.mxu0 0.0
    %351 = vmatpush1.msra.mxu0 %v225
    %352 = vmatprep.subr.mxu0 0.0
    %353 = vmatpush1.msra.mxu0 %v224
    %354 = vmatprep.subr.mxu0 0.0
    %355 = vmatpush1.msra.mxu0 %v223
    %356 = vmatprep.subr.mxu0 0.0
    %357 = vmatpush1.msra.mxu0 %v222
    %358 = vmatprep.subr.mxu0 0.0
    %359 = vmatpush1.msra.mxu0 %v221
    %360 = vmatprep.subr.mxu0 0.0
    %361 = vmatpush2.msra.mxu0 0.0
    %362 = vmatprep.subr.mxu0 0.0
    %363 = vmatpush2.msra.mxu0 0.0
    %364 = vmatprep.subr.mxu0 0.0
    %365 = vmatpush2.msra.mxu0 0.0
    %366 = vmatprep.subr.mxu0 0.0
    %367 = vmatpush2.msra.mxu0 0.0
    %368 = vmatprep.subr.mxu0 0.0
    %369 = vmatpush2.msra.mxu0 0.0
    %370 = vmatprep.subr.mxu0 0.0
    %371 = vmatpush2.msra.mxu0 0.0
    %372 = vmatprep.subr.mxu0 0.0
    %373 = vmatpush2.msra.mxu0 0.0
    %374 = vmatprep.subr.mxu0 0.0
    %375 = vmatpush2.msra.mxu0 0.0
    %376 = vmatprep.subr.mxu0 0.0
    %377 = vmatpush2.msra.mxu0 0.0
    %378 = vmatprep.subr.mxu0 0.0
    %379 = vmatpush2.msra.mxu0 0.0
    %380 = vmatprep.subr.mxu0 0.0
    %381 = vmatpush2.msra.mxu0 0.0
    %382 = vmatprep.subr.mxu0 0.0
    %383 = vmatpush2.msra.mxu0 0.0
    %384 = vmatprep.subr.mxu0 0.0
    %385 = vmatpush2.msra.mxu0 0.0
    %386 = vmatprep.subr.mxu0 0.0
    %387 = vmatpush2.msra.mxu0 0.0
    %388 = vmatprep.subr.mxu0 0.0
    %389 = vmatpush2.msra.mxu0 0.0
    %390 = vmatprep.subr.mxu0 0.0
    %391 = vmatpush2.msra.mxu0 0.0
    %392 = vmatprep.mubr.f32.mxu0 0.0
    %393 = vmatmul.mubr.f32.gmra.mxu0 %v132
    %v394 = vpop.f32.mrf.mxu0
    %v395 = vadd.f32 %v320, %v394
    %v396 = vpop.f32.mrf.mxu0
    %397 = vmatprep.mubr.f32.mxu0 0.0
    %398 = vmatmul.mubr.f32.gmra.mxu0 %v137
    %v399 = vpop.f32.mrf.mxu0
    %v400 = vadd.f32 %v325, %v399
    %v401 = vpop.f32.mrf.mxu0
    %402 = vdwg.mxu0
    %v403 = vld [vmem:[%s1 + $0x100] sm:$0xff]
    %v404 = vld [vmem:[%s1 + $0x108] sm:$0xff]
    %v405 = vld [vmem:[%s1 + $0x110] sm:$0xff]
    %v406 = vld [vmem:[%s1 + $0x118] sm:$0xff]
    %v407 = vld [vmem:[%s1 + $0x120] sm:$0xff]
    %v408 = vld [vmem:[%s1 + $0x128] sm:$0xff]
    %v409 = vld [vmem:[%s1 + $0x130] sm:$0xff]
    %v410 = vld [vmem:[%s1 + $0x138] sm:$0xff]
    %v411 = vld [vmem:[%s1 + $0x140] sm:$0xff]
    %v412 = vld [vmem:[%s1 + $0x148] sm:$0xff]
    %v413 = vld [vmem:[%s1 + $0x150] sm:$0xff]
    %v414 = vld [vmem:[%s1 + $0x158] sm:$0xff]
    %v415 = vld [vmem:[%s1 + $0x160] sm:$0xff]
    %v416 = vld [vmem:[%s1 + $0x168] sm:$0xff]
    %v417 = vld [vmem:[%s1 + $0x170] sm:$0xff]
    %v418 = vld [vmem:[%s1 + $0x178] sm:$0xff]
    %419 = vmatprep.subr.mxu0 0.0
    %420 = vmatpush1.msra.mxu0 %v418
    %421 = vmatprep.subr.mxu0 0.0
    %422 = vmatpush1.msra.mxu0 %v417
    %423 = vmatprep.subr.mxu0 0.0
    %424 = vmatpush1.msra.mxu0 %v416
    %425 = vmatprep.subr.mxu0 0.0
    %426 = vmatpush1.msra.mxu0 %v415
    %427 = vmatprep.subr.mxu0 0.0
    %428 = vmatpush1.msra.mxu0 %v414
    %429 = vmatprep.subr.mxu0 0.0
    %430 = vmatpush1.msra.mxu0 %v413
    %431 = vmatprep.subr.mxu0 0.0
    %432 = vmatpush1.msra.mxu0 %v412
    %433 = vmatprep.subr.mxu0 0.0
    %434 = vmatpush1.msra.mxu0 %v411
    %435 = vmatprep.subr.mxu0 0.0
    %436 = vmatpush1.msra.mxu0 %v410
    %437 = vmatprep.subr.mxu0 0.0
    %438 = vmatpush1.msra.mxu0 %v409
    %439 = vmatprep.subr.mxu0 0.0
    %440 = vmatpush1.msra.mxu0 %v408
    %441 = vmatprep.subr.mxu0 0.0
    %442 = vmatpush1.msra.mxu0 %v407
    %443 = vmatprep.subr.mxu0 0.0
    %444 = vmatpush1.msra.mxu0 %v406
    %445 = vmatprep.subr.mxu0 0.0
    %446 = vmatpush1.msra.mxu0 %v405
    %447 = vmatprep.subr.mxu0 0.0
    %448 = vmatpush1.msra.mxu0 %v404
    %449 = vmatprep.subr.mxu0 0.0
    %450 = vmatpush1.msra.mxu0 %v403
    %451 = vmatprep.subr.mxu0 0.0
    %452 = vmatpush2.msra.mxu0 0.0
    %453 = vmatprep.subr.mxu0 0.0
    %454 = vmatpush2.msra.mxu0 0.0
    %455 = vmatprep.subr.mxu0 0.0
    %456 = vmatpush2.msra.mxu0 0.0
    %457 = vmatprep.subr.mxu0 0.0
    %458 = vmatpush2.msra.mxu0 0.0
    %459 = vmatprep.subr.mxu0 0.0
    %460 = vmatpush2.msra.mxu0 0.0
    %461 = vmatprep.subr.mxu0 0.0
    %462 = vmatpush2.msra.mxu0 0.0
    %463 = vmatprep.subr.mxu0 0.0
    %464 = vmatpush2.msra.mxu0 0.0
    %465 = vmatprep.subr.mxu0 0.0
    %466 = vmatpush2.msra.mxu0 0.0
    %467 = vmatprep.subr.mxu0 0.0
    %468 = vmatpush2.msra.mxu0 0.0
    %469 = vmatprep.subr.mxu0 0.0
    %470 = vmatpush2.msra.mxu0 0.0
    %471 = vmatprep.subr.mxu0 0.0
    %472 = vmatpush2.msra.mxu0 0.0
    %473 = vmatprep.subr.mxu0 0.0
    %474 = vmatpush2.msra.mxu0 0.0
    %475 = vmatprep.subr.mxu0 0.0
    %476 = vmatpush2.msra.mxu0 0.0
    %477 = vmatprep.subr.mxu0 0.0
    %478 = vmatpush2.msra.mxu0 0.0
    %479 = vmatprep.subr.mxu0 0.0
    %480 = vmatpush2.msra.mxu0 0.0
    %481 = vmatprep.subr.mxu0 0.0
    %482 = vmatpush2.msra.mxu0 0.0
    %483 = vmatprep.mubr.f32.mxu0 0.0
    %484 = vmatmul.mubr.f32.gmra.mxu0 %v213
    %v485 = vpop.f32.mrf.mxu0
    %v486 = vadd.f32 0.0, %v485
    %v487 = vpop.f32.mrf.mxu0
    %488 = vmatprep.mubr.f32.mxu0 0.0
    %489 = vmatmul.mubr.f32.gmra.mxu0 %v218
    %v490 = vpop.f32.mrf.mxu0
    %v491 = vadd.f32 0.0, %v490
    %v492 = vpop.f32.mrf.mxu0
    %493 = vdwg.mxu0
    %v494 = vadd.f32 %v395, %v486
    %v495 = vadd.f32 %v400, %v491
    %v496 = vadd.f32 %v494, %v495
    %v497 = vrot.slane %v496, 4
    %v498 = vadd.f32 %v496, %v497
    %v499 = vrot.slane %v498, 2
    %v500 = vadd.f32 %v498, %v499
    %v501 = vrot.slane %v500, 1
    %v502 = vadd.f32 %v500, %v501
    %503 = vrot.lane.b32.xlu0 %v502, 4
    %v504 = vpop.permute.xlu0 %503
    %v505 = vadd.f32 %v502, %v504
    %506 = vrot.lane.b32.xlu0 %v505, 8
    %v507 = vpop.permute.xlu0 %506
    %v508 = vadd.f32 %v505, %v507
    %509 = vrot.lane.b32.xlu0 %v508, 16
    %v510 = vpop.permute.xlu0 %509
    %v511 = vadd.f32 %v508, %v510
    %512 = vrot.lane.b32.xlu0 %v511, 32
    %v513 = vpop.permute.xlu0 %512
    %v514 = vadd.f32 %v511, %v513
    %515 = vrot.lane.b32.xlu0 %v514, 64
    %v516 = vpop.permute.xlu0 %515
    %v517 = vadd.f32 %v514, %v516
    %v518 = vmul.f32 %v517, 0.001953125
    %v519 = vlaneseq
    %v520 = vshrl.u32 %v519, 7
    %v521 = vsub.s32 0, %v520
    %v522 = vrot.slane %v518, %v521
    %v523 = vsub.f32 %v494, %v522
    %v524 = vsub.f32 %v495, %v522
    %v525 = vmul.f32 %v523, %v523
    %v526 = vmul.f32 %v524, %v524
    %v527 = vadd.f32 %v525, %v526
    %v528 = vrot.slane %v527, 4
    %v529 = vadd.f32 %v527, %v528
    %v530 = vrot.slane %v529, 2
    %v531 = vadd.f32 %v529, %v530
    %v532 = vrot.slane %v531, 1
    %v533 = vadd.f32 %v531, %v532
    %534 = vrot.lane.b32.xlu0 %v533, 4
    %v535 = vpop.permute.xlu0 %534
    %v536 = vadd.f32 %v533, %v535
    %537 = vrot.lane.b32.xlu0 %v536, 8
    %v538 = vpop.permute.xlu0 %537
    %v539 = vadd.f32 %v536, %v538
    %540 = vrot.lane.b32.xlu0 %v539, 16
    %v541 = vpop.permute.xlu0 %540
    %v542 = vadd.f32 %v539, %v541
    %543 = vrot.lane.b32.xlu0 %v542, 32
    %v544 = vpop.permute.xlu0 %543
    %v545 = vadd.f32 %v542, %v544
    %546 = vrot.lane.b32.xlu0 %v545, 64
    %v547 = vpop.permute.xlu0 %546
    %v548 = vadd.f32 %v545, %v547
    %v549 = vmul.f32 %v548, 0.001953125
    %v550 = vadd.f32 %v549, 1e-05
    %v551 = vrsqrt.pop %v550
    %v552 = vmul.f32 %v54, %v551
    %v553 = vlaneseq
    %v554 = vshrl.u32 %v553, 7
    %v555 = vsub.s32 0, %v554
    %v556 = vrot.slane %v552, %v555
    %v557 = vmul.f32 %v523, %v556
    %v558 = vmul.f32 %v524, %v556
    %v559 = vlaneseq
    %v560 = vshrl.u32 %v559, 7
    %v561 = vsub.s32 0, %v560
    %v562 = vrot.slane %v55, %v561
    %v563 = vadd.f32 %v557, %v562
    %v564 = vadd.f32 %v558, %v562
    %v565 = vmax.f32 %v563, 0.0
    %v566 = vmax.f32 %v564, 0.0
    %567 = vmatprep.subr.mxu0 0.0
    %568 = vmatpush1.msra.mxu0 0.0
    %569 = vmatprep.subr.mxu0 0.0
    %570 = vmatpush1.msra.mxu0 0.0
    %571 = vmatprep.subr.mxu0 0.0
    %572 = vmatpush1.msra.mxu0 0.0
    %573 = vmatprep.subr.mxu0 0.0
    %574 = vmatpush1.msra.mxu0 0.0
    %575 = vmatprep.subr.mxu0 0.0
    %576 = vmatpush1.msra.mxu0 0.0
    %577 = vmatprep.subr.mxu0 0.0
    %578 = vmatpush1.msra.mxu0 0.0
    %579 = vmatprep.subr.mxu0 0.0
    %580 = vmatpush1.msra.mxu0 0.0
    %581 = vmatprep.subr.mxu0 0.0
    %582 = vmatpush1.msra.mxu0 0.0
    %583 = vmatprep.subr.mxu0 0.0
    %584 = vmatpush1.msra.mxu0 0.0
    %585 = vmatprep.subr.mxu0 0.0
    %586 = vmatpush1.msra.mxu0 0.0
    %587 = vmatprep.subr.mxu0 0.0
    %588 = vmatpush1.msra.mxu0 0.0
    %589 = vmatprep.subr.mxu0 0.0
    %590 = vmatpush1.msra.mxu0 0.0
    %591 = vmatprep.subr.mxu0 0.0
    %592 = vmatpush1.msra.mxu0 0.0
    %593 = vmatprep.subr.mxu0 0.0
    %594 = vmatpush1.msra.mxu0 0.0
    %595 = vmatprep.subr.mxu0 0.0
    %596 = vmatpush1.msra.mxu0 %v566
    %597 = vmatprep.subr.mxu0 0.0
    %598 = vmatpush1.msra.mxu0 %v565
    %599 = vmatprep.subr.mxu0 0.0
    %600 = vmatpush2.msra.mxu0 0.0
    %601 = vmatprep.subr.mxu0 0.0
    %602 = vmatpush2.msra.mxu0 0.0
    %603 = vmatprep.subr.mxu0 0.0
    %604 = vmatpush2.msra.mxu0 0.0
    %605 = vmatprep.subr.mxu0 0.0
    %606 = vmatpush2.msra.mxu0 0.0
    %607 = vmatprep.subr.mxu0 0.0
    %608 = vmatpush2.msra.mxu0 0.0
    %609 = vmatprep.subr.mxu0 0.0
    %610 = vmatpush2.msra.mxu0 0.0
    %611 = vmatprep.subr.mxu0 0.0
    %612 = vmatpush2.msra.mxu0 0.0
    %613 = vmatprep.subr.mxu0 0.0
    %614 = vmatpush2.msra.mxu0 0.0
    %615 = vmatprep.subr.mxu0 0.0
    %616 = vmatpush2.msra.mxu0 0.0
    %617 = vmatprep.subr.mxu0 0.0
    %618 = vmatpush2.msra.mxu0 0.0
    %619 = vmatprep.subr.mxu0 0.0
    %620 = vmatpush2.msra.mxu0 0.0
    %621 = vmatprep.subr.mxu0 0.0
    %622 = vmatpush2.msra.mxu0 0.0
    %623 = vmatprep.subr.mxu0 0.0
    %624 = vmatpush2.msra.mxu0 0.0
    %625 = vmatprep.subr.mxu0 0.0
    %626 = vmatpush2.msra.mxu0 0.0
    %627 = vmatprep.subr.mxu0 0.0
    %628 = vmatpush2.msra.mxu0 0.0
    %629 = vmatprep.subr.mxu0 0.0
    %630 = vmatpush2.msra.mxu0 0.0
    %631 = vmatprep.mubr.f32.mxu0 0.0
    %632 = vmatmul.mubr.f32.gmra.mxu0 %v60
    %v633 = vpop.f32.mrf.mxu0
    %v634 = vadd.f32 0.0, %v633
    %v635 = vpop.f32.mrf.mxu0
    %636 = vmatprep.mubr.f32.mxu0 0.0
    %637 = vmatmul.mubr.f32.gmra.mxu0 %v63
    %v638 = vpop.f32.mrf.mxu0
    %v639 = vadd.f32 0.0, %v638
    %v640 = vpop.f32.mrf.mxu0
    %641 = vdwg.mxu0
    %642 = vmatprep.subr.mxu0 0.0
    %643 = vmatpush1.msra.mxu0 0.0
    %644 = vmatprep.subr.mxu0 0.0
    %645 = vmatpush1.msra.mxu0 0.0
    %646 = vmatprep.subr.mxu0 0.0
    %647 = vmatpush1.msra.mxu0 0.0
    %648 = vmatprep.subr.mxu0 0.0
    %649 = vmatpush1.msra.mxu0 0.0
    %650 = vmatprep.subr.mxu0 0.0
    %651 = vmatpush1.msra.mxu0 0.0
    %652 = vmatprep.subr.mxu0 0.0
    %653 = vmatpush1.msra.mxu0 0.0
    %654 = vmatprep.subr.mxu0 0.0
    %655 = vmatpush1.msra.mxu0 0.0
    %656 = vmatprep.subr.mxu0 0.0
    %657 = vmatpush1.msra.mxu0 0.0
    %658 = vmatprep.subr.mxu0 0.0
    %659 = vmatpush1.msra.mxu0 0.0
    %660 = vmatprep.subr.mxu0 0.0
    %661 = vmatpush1.msra.mxu0 0.0
    %662 = vmatprep.subr.mxu0 0.0
    %663 = vmatpush1.msra.mxu0 0.0
    %664 = vmatprep.subr.mxu0 0.0
    %665 = vmatpush1.msra.mxu0 0.0
    %666 = vmatprep.subr.mxu0 0.0
    %667 = vmatpush1.msra.mxu0 0.0
    %668 = vmatprep.subr.mxu0 0.0
    %669 = vmatpush1.msra.mxu0 0.0
    %670 = vmatprep.subr.mxu0 0.0
    %671 = vmatpush1.msra.mxu0 %v566
    %672 = vmatprep.subr.mxu0 0.0
    %673 = vmatpush1.msra.mxu0 %v565
    %674 = vmatprep.subr.mxu0 0.0
    %675 = vmatpush2.msra.mxu0 0.0
    %676 = vmatprep.subr.mxu0 0.0
    %677 = vmatpush2.msra.mxu0 0.0
    %678 = vmatprep.subr.mxu0 0.0
    %679 = vmatpush2.msra.mxu0 0.0
    %680 = vmatprep.subr.mxu0 0.0
    %681 = vmatpush2.msra.mxu0 0.0
    %682 = vmatprep.subr.mxu0 0.0
    %683 = vmatpush2.msra.mxu0 0.0
    %684 = vmatprep.subr.mxu0 0.0
    %685 = vmatpush2.msra.mxu0 0.0
    %686 = vmatprep.subr.mxu0 0.0
    %687 = vmatpush2.msra.mxu0 0.0
    %688 = vmatprep.subr.mxu0 0.0
    %689 = vmatpush2.msra.mxu0 0.0
    %690 = vmatprep.subr.mxu0 0.0
    %691 = vmatpush2.msra.mxu0 0.0
    %692 = vmatprep.subr.mxu0 0.0
    %693 = vmatpush2.msra.mxu0 0.0
    %694 = vmatprep.subr.mxu0 0.0
    %695 = vmatpush2.msra.mxu0 0.0
    %696 = vmatprep.subr.mxu0 0.0
    %697 = vmatpush2.msra.mxu0 0.0
    %698 = vmatprep.subr.mxu0 0.0
    %699 = vmatpush2.msra.mxu0 0.0
    %700 = vmatprep.subr.mxu0 0.0
    %701 = vmatpush2.msra.mxu0 0.0
    %702 = vmatprep.subr.mxu0 0.0
    %703 = vmatpush2.msra.mxu0 0.0
    %704 = vmatprep.subr.mxu0 0.0
    %705 = vmatpush2.msra.mxu0 0.0
    %706 = vmatprep.mubr.f32.mxu0 0.0
    %707 = vmatmul.mubr.f32.gmra.mxu0 %v141
    %v708 = vpop.f32.mrf.mxu0
    %v709 = vadd.f32 0.0, %v708
    %v710 = vpop.f32.mrf.mxu0
    %711 = vmatprep.mubr.f32.mxu0 0.0
    %712 = vmatmul.mubr.f32.gmra.mxu0 %v144
    %v713 = vpop.f32.mrf.mxu0
    %v714 = vadd.f32 0.0, %v713
    %v715 = vpop.f32.mrf.mxu0
    %716 = vdwg.mxu0
    %v717 = vld [vmem:[#allocation2] sm:$0xff]
    %v718 = vld [vmem:[#allocation2 + $0x8] sm:$0xff]
    %v719 = vld [vmem:[#allocation2 + $0x10] sm:$0xff]
    %v720 = vld [vmem:[#allocation2 + $0x18] sm:$0xff]
    %v721 = vld [vmem:[#allocation2 + $0x20] sm:$0xff]
    %v722 = vld [vmem:[#allocation2 + $0x28] sm:$0xff]
    %v723 = vld [vmem:[#allocation2 + $0x30] sm:$0xff]
    %v724 = vld [vmem:[#allocation2 + $0x38] sm:$0xff]
    %v725 = vld [vmem:[#allocation2 + $0x40] sm:$0xff]
    %v726 = vld [vmem:[#allocation2 + $0x48] sm:$0xff]
    %v727 = vld [vmem:[#allocation2 + $0x50] sm:$0xff]
    %v728 = vld [vmem:[#allocation2 + $0x58] sm:$0xff]
    %v729 = vld [vmem:[#allocation2 + $0x60] sm:$0xff]
    %v730 = vld [vmem:[#allocation2 + $0x68] sm:$0xff]
    %v731 = vld [vmem:[#allocation2 + $0x70] sm:$0xff]
    %v732 = vld [vmem:[#allocation2 + $0x78] sm:$0xff]
    %v733 = vld [vmem:[#allocation2 + $0x80] sm:$0xff]
    %v734 = vld [vmem:[#allocation2 + $0x88] sm:$0xff]
    %v735 = vld [vmem:[#allocation2 + $0x90] sm:$0xff]
    %v736 = vld [vmem:[#allocation2 + $0x98] sm:$0xff]
    %v737 = vld [vmem:[#allocation2 + $0xa0] sm:$0xff]
    %v738 = vld [vmem:[#allocation2 + $0xa8] sm:$0xff]
    %v739 = vld [vmem:[#allocation2 + $0xb0] sm:$0xff]
    %v740 = vld [vmem:[#allocation2 + $0xb8] sm:$0xff]
    %v741 = vld [vmem:[#allocation2 + $0xc0] sm:$0xff]
    %v742 = vld [vmem:[#allocation2 + $0xc8] sm:$0xff]
    %v743 = vld [vmem:[#allocation2 + $0xd0] sm:$0xff]
    %v744 = vld [vmem:[#allocation2 + $0xd8] sm:$0xff]
    %v745 = vld [vmem:[#allocation2 + $0xe0] sm:$0xff]
    %v746 = vld [vmem:[#allocation2 + $0xe8] sm:$0xff]
    %v747 = vld [vmem:[#allocation2 + $0xf0] sm:$0xff]
    %v748 = vld [vmem:[#allocation2 + $0xf8] sm:$0xff]
    %749 = vmatprep.subr.mxu0 0.0
    %750 = vmatpush1.msra.mxu0 %v748
    %751 = vmatprep.subr.mxu0 0.0
    %752 = vmatpush1.msra.mxu0 %v747
    %753 = vmatprep.subr.mxu0 0.0
    %754 = vmatpush1.msra.mxu0 %v746
    %755 = vmatprep.subr.mxu0 0.0
    %756 = vmatpush1.msra.mxu0 %v745
    %757 = vmatprep.subr.mxu0 0.0
    %758 = vmatpush1.msra.mxu0 %v744
    %759 = vmatprep.subr.mxu0 0.0
    %760 = vmatpush1.msra.mxu0 %v743
    %761 = vmatprep.subr.mxu0 0.0
    %762 = vmatpush1.msra.mxu0 %v742
    %763 = vmatprep.subr.mxu0 0.0
    %764 = vmatpush1.msra.mxu0 %v741
    %765 = vmatprep.subr.mxu0 0.0
    %766 = vmatpush1.msra.mxu0 %v740
    %767 = vmatprep.subr.mxu0 0.0
    %768 = vmatpush1.msra.mxu0 %v739
    %769 = vmatprep.subr.mxu0 0.0
    %770 = vmatpush1.msra.mxu0 %v738
    %771 = vmatprep.subr.mxu0 0.0
    %772 = vmatpush1.msra.mxu0 %v737
    %773 = vmatprep.subr.mxu0 0.0
    %774 = vmatpush1.msra.mxu0 %v736
    %775 = vmatprep.subr.mxu0 0.0
    %776 = vmatpush1.msra.mxu0 %v735
    %777 = vmatprep.subr.mxu0 0.0
    %778 = vmatpush1.msra.mxu0 %v734
    %779 = vmatprep.subr.mxu0 0.0
    %780 = vmatpush1.msra.mxu0 %v733
    %781 = vmatprep.subr.mxu0 0.0
    %782 = vmatpush2.msra.mxu0 0.0
    %783 = vmatprep.subr.mxu0 0.0
    %784 = vmatpush2.msra.mxu0 0.0
    %785 = vmatprep.subr.mxu0 0.0
    %786 = vmatpush2.msra.mxu0 0.0
    %787 = vmatprep.subr.mxu0 0.0
    %788 = vmatpush2.msra.mxu0 0.0
    %789 = vmatprep.subr.mxu0 0.0
    %790 = vmatpush2.msra.mxu0 0.0
    %791 = vmatprep.subr.mxu0 0.0
    %792 = vmatpush2.msra.mxu0 0.0
    %793 = vmatprep.subr.mxu0 0.0
    %794 = vmatpush2.msra.mxu0 0.0
    %795 = vmatprep.subr.mxu0 0.0
    %796 = vmatpush2.msra.mxu0 0.0
    %797 = vmatprep.subr.mxu0 0.0
    %798 = vmatpush2.msra.mxu0 0.0
    %799 = vmatprep.subr.mxu0 0.0
    %800 = vmatpush2.msra.mxu0 0.0
    %801 = vmatprep.subr.mxu0 0.0
    %802 = vmatpush2.msra.mxu0 0.0
    %803 = vmatprep.subr.mxu0 0.0
    %804 = vmatpush2.msra.mxu0 0.0
    %805 = vmatprep.subr.mxu0 0.0
    %806 = vmatpush2.msra.mxu0 0.0
    %807 = vmatprep.subr.mxu0 0.0
    %808 = vmatpush2.msra.mxu0 0.0
    %809 = vmatprep.subr.mxu0 0.0
    %810 = vmatpush2.msra.mxu0 0.0
    %811 = vmatprep.subr.mxu0 0.0
    %812 = vmatpush2.msra.mxu0 0.0
    %813 = vmatprep.mubr.f32.mxu0 0.0
    %814 = vmatmul.mubr.f32.gmra.mxu0 %v565
    %v815 = vpop.f32.mrf.mxu0
    %v816 = vadd.f32 0.0, %v815
    %v817 = vpop.f32.mrf.mxu0
    %818 = vmatprep.mubr.f32.mxu0 0.0
    %819 = vmatmul.mubr.f32.gmra.mxu0 %v566
    %v820 = vpop.f32.mrf.mxu0
    %v821 = vadd.f32 0.0, %v820
    %v822 = vpop.f32.mrf.mxu0
    %823 = vdwg.mxu0
    %824 = vmatprep.subr.mxu0 0.0
    %825 = vmatpush1.msra.mxu0 %v732
    %826 = vmatprep.subr.mxu0 0.0
    %827 = vmatpush1.msra.mxu0 %v731
    %828 = vmatprep.subr.mxu0 0.0
    %829 = vmatpush1.msra.mxu0 %v730
    %830 = vmatprep.subr.mxu0 0.0
    %831 = vmatpush1.msra.mxu0 %v729
    %832 = vmatprep.subr.mxu0 0.0
    %833 = vmatpush1.msra.mxu0 %v728
    %834 = vmatprep.subr.mxu0 0.0
    %835 = vmatpush1.msra.mxu0 %v727
    %836 = vmatprep.subr.mxu0 0.0
    %837 = vmatpush1.msra.mxu0 %v726
    %838 = vmatprep.subr.mxu0 0.0
    %839 = vmatpush1.msra.mxu0 %v725
    %840 = vmatprep.subr.mxu0 0.0
    %841 = vmatpush1.msra.mxu0 %v724
    %842 = vmatprep.subr.mxu0 0.0
    %843 = vmatpush1.msra.mxu0 %v723
    %844 = vmatprep.subr.mxu0 0.0
    %845 = vmatpush1.msra.mxu0 %v722
    %846 = vmatprep.subr.mxu0 0.0
    %847 = vmatpush1.msra.mxu0 %v721
    %848 = vmatprep.subr.mxu0 0.0
    %849 = vmatpush1.msra.mxu0 %v720
    %850 = vmatprep.subr.mxu0 0.0
    %851 = vmatpush1.msra.mxu0 %v719
    %852 = vmatprep.subr.mxu0 0.0
    %853 = vmatpush1.msra.mxu0 %v718
    %854 = vmatprep.subr.mxu0 0.0
    %855 = vmatpush1.msra.mxu0 %v717
    %856 = vmatprep.subr.mxu0 0.0
    %857 = vmatpush2.msra.mxu0 0.0
    %858 = vmatprep.subr.mxu0 0.0
    %859 = vmatpush2.msra.mxu0 0.0
    %860 = vmatprep.subr.mxu0 0.0
    %861 = vmatpush2.msra.mxu0 0.0
    %862 = vmatprep.subr.mxu0 0.0
    %863 = vmatpush2.msra.mxu0 0.0
    %864 = vmatprep.subr.mxu0 0.0
    %865 = vmatpush2.msra.mxu0 0.0
    %866 = vmatprep.subr.mxu0 0.0
    %867 = vmatpush2.msra.mxu0 0.0
    %868 = vmatprep.subr.mxu0 0.0
    %869 = vmatpush2.msra.mxu0 0.0
    %870 = vmatprep.subr.mxu0 0.0
    %871 = vmatpush2.msra.mxu0 0.0
    %872 = vmatprep.subr.mxu0 0.0
    %873 = vmatpush2.msra.mxu0 0.0
    %874 = vmatprep.subr.mxu0 0.0
    %875 = vmatpush2.msra.mxu0 0.0
    %876 = vmatprep.subr.mxu0 0.0
    %877 = vmatpush2.msra.mxu0 0.0
    %878 = vmatprep.subr.mxu0 0.0
    %879 = vmatpush2.msra.mxu0 0.0
    %880 = vmatprep.subr.mxu0 0.0
    %881 = vmatpush2.msra.mxu0 0.0
    %882 = vmatprep.subr.mxu0 0.0
    %883 = vmatpush2.msra.mxu0 0.0
    %884 = vmatprep.subr.mxu0 0.0
    %885 = vmatpush2.msra.mxu0 0.0
    %886 = vmatprep.subr.mxu0 0.0
    %887 = vmatpush2.msra.mxu0 0.0
    %888 = vmatprep.mubr.f32.mxu0 0.0
    %889 = vmatmul.mubr.f32.gmra.mxu0 %v634
    %v890 = vpop.f32.mrf.mxu0
    %v891 = vadd.f32 %v816, %v890
    %v892 = vpop.f32.mrf.mxu0
    %893 = vmatprep.mubr.f32.mxu0 0.0
    %894 = vmatmul.mubr.f32.gmra.mxu0 %v639
    %v895 = vpop.f32.mrf.mxu0
    %v896 = vadd.f32 %v821, %v895
    %v897 = vpop.f32.mrf.mxu0
    %898 = vdwg.mxu0
    %v899 = vld [vmem:[#allocation2 + $0x100] sm:$0xff]
    %v900 = vld [vmem:[#allocation2 + $0x108] sm:$0xff]
    %v901 = vld [vmem:[#allocation2 + $0x110] sm:$0xff]
    %v902 = vld [vmem:[#allocation2 + $0x118] sm:$0xff]
    %v903 = vld [vmem:[#allocation2 + $0x120] sm:$0xff]
    %v904 = vld [vmem:[#allocation2 + $0x128] sm:$0xff]
    %v905 = vld [vmem:[#allocation2 + $0x130] sm:$0xff]
    %v906 = vld [vmem:[#allocation2 + $0x138] sm:$0xff]
    %v907 = vld [vmem:[#allocation2 + $0x140] sm:$0xff]
    %v908 = vld [vmem:[#allocation2 + $0x148] sm:$0xff]
    %v909 = vld [vmem:[#allocation2 + $0x150] sm:$0xff]
    %v910 = vld [vmem:[#allocation2 + $0x158] sm:$0xff]
    %v911 = vld [vmem:[#allocation2 + $0x160] sm:$0xff]
    %v912 = vld [vmem:[#allocation2 + $0x168] sm:$0xff]
    %v913 = vld [vmem:[#allocation2 + $0x170] sm:$0xff]
    %v914 = vld [vmem:[#allocation2 + $0x178] sm:$0xff]
    %915 = vmatprep.subr.mxu0 0.0
    %916 = vmatpush1.msra.mxu0 %v914
    %917 = vmatprep.subr.mxu0 0.0
    %918 = vmatpush1.msra.mxu0 %v913
    %919 = vmatprep.subr.mxu0 0.0
    %920 = vmatpush1.msra.mxu0 %v912
    %921 = vmatprep.subr.mxu0 0.0
    %922 = vmatpush1.msra.mxu0 %v911
    %923 = vmatprep.subr.mxu0 0.0
    %924 = vmatpush1.msra.mxu0 %v910
    %925 = vmatprep.subr.mxu0 0.0
    %926 = vmatpush1.msra.mxu0 %v909
    %927 = vmatprep.subr.mxu0 0.0
    %928 = vmatpush1.msra.mxu0 %v908
    %929 = vmatprep.subr.mxu0 0.0
    %930 = vmatpush1.msra.mxu0 %v907
    %931 = vmatprep.subr.mxu0 0.0
    %932 = vmatpush1.msra.mxu0 %v906
    %933 = vmatprep.subr.mxu0 0.0
    %934 = vmatpush1.msra.mxu0 %v905
    %935 = vmatprep.subr.mxu0 0.0
    %936 = vmatpush1.msra.mxu0 %v904
    %937 = vmatprep.subr.mxu0 0.0
    %938 = vmatpush1.msra.mxu0 %v903
    %939 = vmatprep.subr.mxu0 0.0
    %940 = vmatpush1.msra.mxu0 %v902
    %941 = vmatprep.subr.mxu0 0.0
    %942 = vmatpush1.msra.mxu0 %v901
    %943 = vmatprep.subr.mxu0 0.0
    %944 = vmatpush1.msra.mxu0 %v900
    %945 = vmatprep.subr.mxu0 0.0
    %946 = vmatpush1.msra.mxu0 %v899
    %947 = vmatprep.subr.mxu0 0.0
    %948 = vmatpush2.msra.mxu0 0.0
    %949 = vmatprep.subr.mxu0 0.0
    %950 = vmatpush2.msra.mxu0 0.0
    %951 = vmatprep.subr.mxu0 0.0
    %952 = vmatpush2.msra.mxu0 0.0
    %953 = vmatprep.subr.mxu0 0.0
    %954 = vmatpush2.msra.mxu0 0.0
    %955 = vmatprep.subr.mxu0 0.0
    %956 = vmatpush2.msra.mxu0 0.0
    %957 = vmatprep.subr.mxu0 0.0
    %958 = vmatpush2.msra.mxu0 0.0
    %959 = vmatprep.subr.mxu0 0.0
    %960 = vmatpush2.msra.mxu0 0.0
    %961 = vmatprep.subr.mxu0 0.0
    %962 = vmatpush2.msra.mxu0 0.0
    %963 = vmatprep.subr.mxu0 0.0
    %964 = vmatpush2.msra.mxu0 0.0
    %965 = vmatprep.subr.mxu0 0.0
    %966 = vmatpush2.msra.mxu0 0.0
    %967 = vmatprep.subr.mxu0 0.0
    %968 = vmatpush2.msra.mxu0 0.0
    %969 = vmatprep.subr.mxu0 0.0
    %970 = vmatpush2.msra.mxu0 0.0
    %971 = vmatprep.subr.mxu0 0.0
    %972 = vmatpush2.msra.mxu0 0.0
    %973 = vmatprep.subr.mxu0 0.0
    %974 = vmatpush2.msra.mxu0 0.0
    %975 = vmatprep.subr.mxu0 0.0
    %976 = vmatpush2.msra.mxu0 0.0
    %977 = vmatprep.subr.mxu0 0.0
    %978 = vmatpush2.msra.mxu0 0.0
    %979 = vmatprep.mubr.f32.mxu0 0.0
    %980 = vmatmul.mubr.f32.gmra.mxu0 %v709
    %v981 = vpop.f32.mrf.mxu0
    %v982 = vadd.f32 0.0, %v981
    %v983 = vpop.f32.mrf.mxu0
    %984 = vmatprep.mubr.f32.mxu0 0.0
    %985 = vmatmul.mubr.f32.gmra.mxu0 %v714
    %v986 = vpop.f32.mrf.mxu0
    %v987 = vadd.f32 0.0, %v986
    %v988 = vpop.f32.mrf.mxu0
    %989 = vdwg.mxu0
    %v990 = vadd.f32 %v891, %v982
    %v991 = vadd.f32 %v896, %v987
    %v992 = vadd.f32 %v990, %v991
    %v993 = vrot.slane %v992, 4
    %v994 = vadd.f32 %v992, %v993
    %v995 = vrot.slane %v994, 2
    %v996 = vadd.f32 %v994, %v995
    %v997 = vrot.slane %v996, 1
    %v998 = vadd.f32 %v996, %v997
    %999 = vrot.lane.b32.xlu0 %v998, 4
    %v1000 = vpop.permute.xlu0 %999
    %v1001 = vadd.f32 %v998, %v1000
    %1002 = vrot.lane.b32.xlu0 %v1001, 8
    %v1003 = vpop.permute.xlu0 %1002
    %v1004 = vadd.f32 %v1001, %v1003
    %1005 = vrot.lane.b32.xlu0 %v1004, 16
    %v1006 = vpop.permute.xlu0 %1005
    %v1007 = vadd.f32 %v1004, %v1006
    %1008 = vrot.lane.b32.xlu0 %v1007, 32
    %v1009 = vpop.permute.xlu0 %1008
    %v1010 = vadd.f32 %v1007, %v1009
    %1011 = vrot.lane.b32.xlu0 %v1010, 64
    %v1012 = vpop.permute.xlu0 %1011
    %v1013 = vadd.f32 %v1010, %v1012
    %v1014 = vmul.f32 %v1013, 0.001953125
    %v1015 = vlaneseq
    %v1016 = vshrl.u32 %v1015, 7
    %v1017 = vsub.s32 0, %v1016
    %v1018 = vrot.slane %v1014, %v1017
    %v1019 = vsub.f32 %v990, %v1018
    %v1020 = vsub.f32 %v991, %v1018
    %v1021 = vmul.f32 %v1019, %v1019
    %v1022 = vmul.f32 %v1020, %v1020
    %v1023 = vadd.f32 %v1021, %v1022
    %v1024 = vrot.slane %v1023, 4
    %v1025 = vadd.f32 %v1023, %v1024
    %v1026 = vrot.slane %v1025, 2
    %v1027 = vadd.f32 %v1025, %v1026
    %v1028 = vrot.slane %v1027, 1
    %v1029 = vadd.f32 %v1027, %v1028
    %1030 = vrot.lane.b32.xlu0 %v1029, 4
    %v1031 = vpop.permute.xlu0 %1030
    %v1032 = vadd.f32 %v1029, %v1031
    %1033 = vrot.lane.b32.xlu0 %v1032, 8
    %v1034 = vpop.permute.xlu0 %1033
    %v1035 = vadd.f32 %v1032, %v1034
    %1036 = vrot.lane.b32.xlu0 %v1035, 16
    %v1037 = vpop.permute.xlu0 %1036
    %v1038 = vadd.f32 %v1035, %v1037
    %1039 = vrot.lane.b32.xlu0 %v1038, 32
    %v1040 = vpop.permute.xlu0 %1039
    %v1041 = vadd.f32 %v1038, %v1040
    %1042 = vrot.lane.b32.xlu0 %v1041, 64
    %v1043 = vpop.permute.xlu0 %1042
    %v1044 = vadd.f32 %v1041, %v1043
    %v1045 = vmul.f32 %v1044, 0.001953125
    %v1046 = vadd.f32 %v1045, 1e-05
    %v1047 = vrsqrt.pop %v1046
    %v1048 = vmul.f32 %v56, %v1047
    %v1049 = vlaneseq
    %v1050 = vshrl.u32 %v1049, 7
    %v1051 = vsub.s32 0, %v1050
    %v1052 = vrot.slane %v1048, %v1051
    %v1053 = vmul.f32 %v1019, %v1052
    %v1054 = vmul.f32 %v1020, %v1052
    %v1055 = vlaneseq
    %v1056 = vshrl.u32 %v1055, 7
    %v1057 = vsub.s32 0, %v1056
    %v1058 = vrot.slane %v57, %v1057
    %v1059 = vadd.f32 %v1053, %v1058
    %v1060 = vadd.f32 %v1054, %v1058
    %v1061 = vadd.f32 %v1059, %v52
    %v1062 = vadd.f32 %v1060, %v53
    %v1063 = vmax.f32 %v1061, 0.0
    %v1064 = vmax.f32 %v1062, 0.0
    %1065 = vst [vmem:[%s4] sm:$0xff] %v1063
    %1066 = vst [vmem:[%s4 + $0x8] sm:$0xff] %v1064
    // Predicated region
    $region22: #{residual_block_pallas.1} parent=1 // pred_check
      _
    $region23: #{residual_block_pallas.1} parent=1 // pred_check_branch
      %1068 = sbr.rel (0) target = $region25
    $region24: #{residual_block_pallas.1} parent=1 // pred_region
      _
    $region25: #{residual_block_pallas.1} parent=1 // pred_fallthru
      _
    // Predicated region
    $region26: #{residual_block_pallas.1} parent=1 // pred_check
      _
    $region27: #{residual_block_pallas.1} parent=1 // pred_check_branch
      %1070 = sbr.rel (0) target = $region29
    $region28: #{residual_block_pallas.1} parent=1 // pred_region
      _
    $region29: #{residual_block_pallas.1} parent=1 // pred_fallthru
      _
    %1071 = vsyncpa [#allocation3], 1

</llo_original>
